<compile_context>
chip_gen: v6e
topology: v6e:2x2x1
jax: 0.10.0
libtpu: 0.0.40
codegen_flags: <defaults>
</compile_context>

<pallas_src>
import functools

import jax
import jax.numpy as jnp
from jax.experimental import pallas as pl
from jax.experimental.pallas import tpu as pltpu


def _round_up(v, m):
    return (v + m - 1) // m * m


# -----------------------------------------------------------------------------
# Fused  Linear (no bias)  ->  BatchNorm1d (batch stats)  ->  optional ReLU
# -----------------------------------------------------------------------------
def _linear_bn_act_kernel(x_ref, w_ref, g_ref, b_ref, o_ref, acc_ref, *,
                          n_rows, eps, relu):
    """grid = (feature tiles [parallel], K tiles [arbitrary/reduction])."""
    k = pl.program_id(1)

    @pl.when(k == 0)
    def _():
        acc_ref[...] = jnp.zeros_like(acc_ref)

    # MXU matmul: bf16 inputs, f32 accumulation.
    acc_ref[...] += jnp.dot(x_ref[...], w_ref[...],
                            preferred_element_type=jnp.float32)

    @pl.when(k == pl.num_programs(1) - 1)
    def _():
        h = acc_ref[...]                       # (M_pad, tn) f32, pre-BN
        m_pad = h.shape[0]
        inv_n = 1.0 / float(n_rows)

        if n_rows == m_pad:
            sum_h = jnp.sum(h, axis=0, keepdims=True)
            sum_h2 = jnp.sum(h * h, axis=0, keepdims=True)
        else:
            # Mask zero-padded batch rows out of the statistics.
            row_ids = jax.lax.broadcasted_iota(jnp.int32, (m_pad, 1), 0)
            valid = (row_ids < n_rows).astype(jnp.float32)
            hv = h * valid
            sum_h = jnp.sum(hv, axis=0, keepdims=True)
            sum_h2 = jnp.sum(hv * h, axis=0, keepdims=True)

        mean = sum_h * inv_n
        var = sum_h2 * inv_n - mean * mean      # biased variance (PyTorch BN)
        y = (h - mean) * jax.lax.rsqrt(var + eps) * g_ref[...] + b_ref[...]
        if relu:
            y = jnp.maximum(y, 0.0)
        o_ref[...] = y.astype(o_ref.dtype)


def _pick_tiles(M_pad, K, N_pad, out_bytes):
    """Choose (tk, tn) so double-buffered inputs + resident acc/out fit VMEM."""
    budget = 24 * 1024 * 1024          # leave headroom under a 32 MiB scope
    tn = N_pad if N_pad <= 512 else 128
    tk = min(512, _round_up(K, 128))

    def vmem_bytes(tk_, tn_):
        x_blk = M_pad * tk_ * 2 * 2            # bf16, double-buffered
        w_blk = tk_ * tn_ * 2 * 2              # bf16, double-buffered
        gb_blk = 2 * (1 * tn_ * 4 * 2)         # gamma + beta f32
        acc = M_pad * tn_ * 4                  # f32 scratch accumulator
        out = M_pad * tn_ * out_bytes * 2      # resident output (double buf)
        return x_blk + w_blk + gb_blk + acc + out

    while vmem_bytes(tk, tn) > budget and tk > 128:
        tk //= 2
    while vmem_bytes(tk, tn) > budget and tn > 128:
        tn //= 2
    return tk, tn


def linear_bn_act(x, w, gamma, beta, *, relu, eps=1e-5,
                  out_dtype=jnp.float32):
    """y = act(batchnorm1d(x @ w)) with training-mode (batch) statistics.

    x:     (M, K)   any float dtype (cast to bf16 for the MXU)
    w:     (K, N)   weight already transposed to (in, out)
    gamma: (N,)     BN scale
    beta:  (N,)     BN shift
    """
    M, K = x.shape
    Kw, N = w.shape
    assert K == Kw, (K, Kw)

    M_pad = _round_up(max(M, 1), 8)            # adaptive batch tile (no 128 pad)
    N_pad = _round_up(N, 128)                  # lane-dense output stores
    tk, tn = _pick_tiles(M_pad, K, N_pad, jnp.dtype(out_dtype).itemsize)
    K_pad = _round_up(K, tk)

    def maybe_pad(a, widths):
        return a if all(w0 == 0 and w1 == 0 for (w0, w1) in widths) \
            else jnp.pad(a, widths)

    x_p = maybe_pad(x.astype(jnp.bfloat16), ((0, M_pad - M), (0, K_pad - K)))
    w_p = maybe_pad(w.astype(jnp.bfloat16), ((0, K_pad - K), (0, N_pad - N)))
    g_p = maybe_pad(gamma.astype(jnp.float32).reshape(1, N),
                    ((0, 0), (0, N_pad - N)))
    b_p = maybe_pad(beta.astype(jnp.float32).reshape(1, N),
                    ((0, 0), (0, N_pad - N)))

    kernel = functools.partial(_linear_bn_act_kernel,
                               n_rows=M, eps=eps, relu=relu)

    out = pl.pallas_call(
        kernel,
        out_shape=jax.ShapeDtypeStruct((M_pad, N_pad), out_dtype),
        grid=(N_pad // tn, K_pad // tk),
        in_specs=[
            pl.BlockSpec((M_pad, tk), lambda n, k: (0, k)),   # activations
            pl.BlockSpec((tk, tn), lambda n, k: (k, n)),      # weights
            pl.BlockSpec((1, tn), lambda n, k: (0, n)),       # gamma
            pl.BlockSpec((1, tn), lambda n, k: (0, n)),       # beta
        ],
        out_specs=pl.BlockSpec((M_pad, tn), lambda n, k: (0, n)),
        scratch_shapes=[pltpu.VMEM((M_pad, tn), jnp.float32)],
        compiler_params=pltpu.CompilerParams(
            dimension_semantics=("parallel", "arbitrary"),
            vmem_limit_bytes=32 * 1024 * 1024,
        ),
    )(x_p, w_p, g_p, b_p)
    return out[:M, :N]


# -----------------------------------------------------------------------------
# ProjectionHead forward
# -----------------------------------------------------------------------------
def projection_head_forward(params, x, head_type='nonlinear'):
    assert head_type in ('linear', 'nonlinear')
    if head_type == 'linear':
        # LinearLayer(in, out, use_bias=False, use_bn=True)
        return linear_bn_act(x, params['w1'], params['g1'], params['b1'],
                             relu=False, out_dtype=jnp.float32)
    # LinearLayer(in, hid, True, True) -> ReLU -> LinearLayer(hid, out, False, True)
    h = linear_bn_act(x, params['w1'], params['g1'], params['b1'],
                      relu=True, out_dtype=jnp.bfloat16)
    return linear_bn_act(h, params['w2'], params['g2'], params['b2'],
                         relu=False, out_dtype=jnp.float32)


# Pure-JAX reference mirroring the kernel's bf16 MXU inputs (same numerics),
# used for the in-script correctness check.  Parity with full-f32 PyTorch is
# at the ~1% level due to the bf16 matmul inputs.
def projection_head_reference(params, x, head_type='nonlinear', eps=1e-5):
    def lin_bn(h, w, g, b, relu):
        z = jnp.dot(h.astype(jnp.bfloat16), w.astype(jnp.bfloat16),
                    preferred_element_type=jnp.float32)
        mean = jnp.mean(z, axis=0, keepdims=True)
        var = jnp.mean(z * z, axis=0, keepdims=True) - mean * mean
        y = (z - mean) * jax.lax.rsqrt(var + eps) * g[None, :] + b[None, :]
        return jnp.maximum(y, 0.0) if relu else y

    if head_type == 'linear':
        return lin_bn(x, params['w1'], params['g1'], params['b1'], False)
    h = lin_bn(x, params['w1'], params['g1'], params['b1'], True)
    h = h.astype(jnp.bfloat16)
    return lin_bn(h, params['w2'], params['g2'], params['b2'], False)


# -----------------------------------------------------------------------------
# Deterministic synthetic parameter initialization
# -----------------------------------------------------------------------------
def init_projection_head(key, in_features, hidden_features, out_features,
                         head_type='nonlinear'):
    k1, k2, k3, k4 = jax.random.split(key, 4)

    def linear_w(k, fan_in, fan_out):
        lim = 1.0 / float(fan_in) ** 0.5
        # PyTorch stores (out, in); the kernel consumes (in, out).
        return jax.random.uniform(k, (fan_in, fan_out), jnp.float32, -lim, lim)

    def bn(k, c):
        kg, kb = jax.random.split(k)
        # random affine params to exercise the BN scale/shift path
        g = jax.random.uniform(kg, (c,), jnp.float32, 0.5, 1.5)
        b = jax.random.uniform(kb, (c,), jnp.float32, -0.5, 0.5)
        return g, b

    p = {}
    if head_type == 'linear':
        p['w1'] = linear_w(k1, in_features, out_features)
        p['g1'], p['b1'] = bn(k2, out_features)
        return p
    p['w1'] = linear_w(k1, in_features, hidden_features)
    p['g1'], p['b1'] = bn(k2, hidden_features)
    p['w2'] = linear_w(k3, hidden_features, out_features)
    p['g2'], p['b2'] = bn(k4, out_features)
    return p


# -----------------------------------------------------------------------------
if __name__ == "__main__":
    key = jax.random.PRNGKey(0)
    kx, kp, kp_lin = jax.random.split(key, 3)

    batch, in_f, hid_f, out_f = 8, 512, 128, 64
    x = jax.random.normal(kx, (batch, in_f), jnp.float32)

    # --- nonlinear head ---
    params = init_projection_head(kp, in_f, hid_f, out_f, 'nonlinear')
    fwd = jax.jit(lambda p, z: projection_head_forward(p, z, 'nonlinear'))
    out = jax.block_until_ready(fwd(params, x))
    assert out.shape == (batch, out_f), out.shape
    assert bool(jnp.all(jnp.isfinite(out)))
    ref = projection_head_reference(params, x, 'nonlinear')
    err = float(jnp.max(jnp.abs(out - ref)))
    assert err < 5e-2, f"nonlinear head mismatch: max abs err {err}"

    # --- linear head ---
    params_lin = init_projection_head(kp_lin, in_f, hid_f, out_f, 'linear')
    fwd_lin = jax.jit(lambda p, z: projection_head_forward(p, z, 'linear'))
    out_lin = jax.block_until_ready(fwd_lin(params_lin, x))
    assert out_lin.shape == (batch, out_f), out_lin.shape
    assert bool(jnp.all(jnp.isfinite(out_lin)))
    ref_lin = projection_head_reference(params_lin, x, 'linear')
    err_lin = float(jnp.max(jnp.abs(out_lin - ref_lin)))
    assert err_lin < 5e-2, f"linear head mismatch: max abs err {err_lin}"

    print("KERNEL_OK")
</pallas_src>

<mosaic_0001>
module attributes {stable_mosaic.version = 11 : i64} {
  func.func @_linear_bn_act_kernel(%arg0: i32, %arg1: i32, %arg2: memref<8x512xbf16, #tpu.memory_space<vmem>>, %arg3: memref<512x128xbf16, #tpu.memory_space<vmem>>, %arg4: memref<1x128xf32, #tpu.memory_space<vmem>>, %arg5: memref<1x128xf32, #tpu.memory_space<vmem>>, %arg6: memref<8x128xbf16, #tpu.memory_space<vmem>>, %arg7: memref<8x128xf32, #tpu.memory_space<vmem>>) attributes {dimension_semantics = [#tpu.dimension_semantics<parallel>, #tpu.dimension_semantics<arbitrary>], iteration_bounds = array<i64: 1, 1>, scalar_prefetch = 0 : i64, scratch_operands = 1 : i64, tpu.core_type = #tpu.core_type<tc>, window_params = [{transform_indices = @transform_0, window_bounds = array<i64: 8, 512>}, {transform_indices = @transform_1, window_bounds = array<i64: 512, 128>}, {transform_indices = @transform_2, window_bounds = array<i64: 1, 128>}, {transform_indices = @transform_3, window_bounds = array<i64: 1, 128>}, {transform_indices = @transform_4, window_bounds = array<i64: 8, 128>}]} {
    %c0_i32 = arith.constant 0 : i32
    %0 = arith.cmpi eq, %arg1, %c0_i32 : i32
    %1 = arith.extui %0 : i1 to i32
    %c0_i32_0 = arith.constant 0 : i32
    %2 = arith.cmpi ne, %1, %c0_i32_0 : i32
    scf.if %2 {
      %cst_10 = arith.constant 0.000000e+00 : f32
      %12 = vector.broadcast %cst_10 : f32 to vector<8x128xf32>
      %c0_11 = arith.constant 0 : index
      %c0_12 = arith.constant 0 : index
      %13 = vector.load %arg7[%c0_11, %c0_12] : memref<8x128xf32, #tpu.memory_space<vmem>>, vector<8x128xf32>
      tpu.vector_store %arg7[%c0_11, %c0_12], %12 {strides = array<i32>} : memref<8x128xf32, #tpu.memory_space<vmem>>, vector<8x128xf32>,
    } else {
    }
    %c0 = arith.constant 0 : index
    %c0_1 = arith.constant 0 : index
    %3 = vector.load %arg7[%c0, %c0_1] : memref<8x128xf32, #tpu.memory_space<vmem>>, vector<8x128xf32>
    %c0_2 = arith.constant 0 : index
    %c0_3 = arith.constant 0 : index
    %4 = vector.load %arg2[%c0_2, %c0_3] : memref<8x512xbf16, #tpu.memory_space<vmem>>, vector<8x512xbf16>
    %c0_4 = arith.constant 0 : index
    %c0_5 = arith.constant 0 : index
    %5 = vector.load %arg3[%c0_4, %c0_5] : memref<512x128xbf16, #tpu.memory_space<vmem>>, vector<512x128xbf16>
    %cst = arith.constant dense<0.000000e+00> : vector<8x128xf32>
    %6 = tpu.matmul %4, %5, %cst {dimension_numbers = #tpu.dot_dimension_numbers<[1], [0], [0], [1], [0, 0, 1, 1], [], []>} : vector<8x512xbf16>, vector<512x128xbf16>, vector<8x128xf32> -> vector<8x128xf32>
    %7 = arith.addf %3, %6 : vector<8x128xf32>
    %c0_6 = arith.constant 0 : index
    %c0_7 = arith.constant 0 : index
    %8 = vector.load %arg7[%c0_6, %c0_7] : memref<8x128xf32, #tpu.memory_space<vmem>>, vector<8x128xf32>
    tpu.vector_store %arg7[%c0_6, %c0_7], %7 {strides = array<i32>} : memref<8x128xf32, #tpu.memory_space<vmem>>, vector<8x128xf32>,
    %c0_i32_8 = arith.constant 0 : i32
    %9 = arith.cmpi eq, %arg1, %c0_i32_8 : i32
    %10 = arith.extui %9 : i1 to i32
    %c0_i32_9 = arith.constant 0 : i32
    %11 = arith.cmpi ne, %10, %c0_i32_9 : i32
    scf.if %11 {
      %c0_10 = arith.constant 0 : index
      %c0_11 = arith.constant 0 : index
      %12 = vector.load %arg7[%c0_10, %c0_11] : memref<8x128xf32, #tpu.memory_space<vmem>>, vector<8x128xf32>
      %cst_12 = arith.constant dense<0.000000e+00> : vector<128xf32>
      %13 = vector.multi_reduction <add>, %12, %cst_12 [0] : vector<8x128xf32> to vector<128xf32>
      %14 = vector.shape_cast %13 : vector<128xf32> to vector<1x128xf32>
      %15 = arith.mulf %12, %12 : vector<8x128xf32>
      %cst_13 = arith.constant dense<0.000000e+00> : vector<128xf32>
      %16 = vector.multi_reduction <add>, %15, %cst_13 [0] : vector<8x128xf32> to vector<128xf32>
      %17 = vector.shape_cast %16 : vector<128xf32> to vector<1x128xf32>
      %cst_14 = arith.constant 1.250000e-01 : f32
      %18 = vector.broadcast %cst_14 : f32 to vector<1x128xf32>
      %19 = arith.mulf %14, %18 : vector<1x128xf32>
      %cst_15 = arith.constant 1.250000e-01 : f32
      %20 = vector.broadcast %cst_15 : f32 to vector<1x128xf32>
      %21 = arith.mulf %17, %20 : vector<1x128xf32>
      %22 = arith.mulf %19, %19 : vector<1x128xf32>
      %23 = arith.subf %21, %22 : vector<1x128xf32>
      %24 = vector.broadcast %19 : vector<1x128xf32> to vector<8x128xf32>
      %25 = arith.subf %12, %24 : vector<8x128xf32>
      %cst_16 = arith.constant 9.99999974E-6 : f32
      %26 = vector.broadcast %cst_16 : f32 to vector<1x128xf32>
      %27 = arith.addf %23, %26 : vector<1x128xf32>
      %28 = math.rsqrt %27 : vector<1x128xf32>
      %29 = vector.broadcast %28 : vector<1x128xf32> to vector<8x128xf32>
      %30 = arith.mulf %25, %29 : vector<8x128xf32>
      %c0_17 = arith.constant 0 : index
      %c0_18 = arith.constant 0 : index
      %31 = vector.load %arg4[%c0_17, %c0_18] : memref<1x128xf32, #tpu.memory_space<vmem>>, vector<1x128xf32>
      %32 = vector.broadcast %31 : vector<1x128xf32> to vector<8x128xf32>
      %33 = arith.mulf %30, %32 : vector<8x128xf32>
      %c0_19 = arith.constant 0 : index
      %c0_20 = arith.constant 0 : index
      %34 = vector.load %arg5[%c0_19, %c0_20] : memref<1x128xf32, #tpu.memory_space<vmem>>, vector<1x128xf32>
      %35 = vector.broadcast %34 : vector<1x128xf32> to vector<8x128xf32>
      %36 = arith.addf %33, %35 : vector<8x128xf32>
      %cst_21 = arith.constant 0.000000e+00 : f32
      %37 = vector.broadcast %cst_21 : f32 to vector<8x128xf32>
      %38 = arith.maximumf %36, %37 : vector<8x128xf32>
      %39 = arith.truncf %38 : vector<8x128xf32> to vector<8x128xbf16>
      %c0_22 = arith.constant 0 : index
      %c0_23 = arith.constant 0 : index
      %40 = vector.load %arg6[%c0_22, %c0_23] : memref<8x128xbf16, #tpu.memory_space<vmem>>, vector<8x128xbf16>
      tpu.vector_store %arg6[%c0_22, %c0_23], %39 {strides = array<i32>} : memref<8x128xbf16, #tpu.memory_space<vmem>>, vector<8x128xbf16>,
    } else {
    }
    return
  }
  func.func @transform_0(%arg0: i32, %arg1: i32) -> (i32, i32) {
    %c0_i32 = arith.constant 0 : i32
    %c0_i32_0 = arith.constant 0 : i32
    return %c0_i32, %arg1 : i32, i32
  }
  func.func @transform_1(%arg0: i32, %arg1: i32) -> (i32, i32) {
    %c0_i32 = arith.constant 0 : i32
    return %arg1, %arg0 : i32, i32
  }
  func.func @transform_2(%arg0: i32, %arg1: i32) -> (i32, i32) {
    %c0_i32 = arith.constant 0 : i32
    %c0_i32_0 = arith.constant 0 : i32
    return %c0_i32, %arg0 : i32, i32
  }
  func.func @transform_3(%arg0: i32, %arg1: i32) -> (i32, i32) {
    %c0_i32 = arith.constant 0 : i32
    %c0_i32_0 = arith.constant 0 : i32
    return %c0_i32, %arg0 : i32, i32
  }
  func.func @transform_4(%arg0: i32, %arg1: i32) -> (i32, i32) {
    %c0_i32 = arith.constant 0 : i32
    %c0_i32_0 = arith.constant 0 : i32
    return %c0_i32, %arg0 : i32, i32
  }
}

module attributes {stable_mosaic.version = 11 : i64} {
  func.func @_linear_bn_act_kernel(%arg0: i32, %arg1: i32, %arg2: memref<8x128xbf16, #tpu.memory_space<vmem>>, %arg3: memref<128x128xbf16, #tpu.memory_space<vmem>>, %arg4: memref<1x128xf32, #tpu.memory_space<vmem>>, %arg5: memref<1x128xf32, #tpu.memory_space<vmem>>, %arg6: memref<8x128xf32, #tpu.memory_space<vmem>>, %arg7: memref<8x128xf32, #tpu.memory_space<vmem>>) attributes {dimension_semantics = [#tpu.dimension_semantics<parallel>, #tpu.dimension_semantics<arbitrary>], iteration_bounds = array<i64: 1, 1>, scalar_prefetch = 0 : i64, scratch_operands = 1 : i64, tpu.core_type = #tpu.core_type<tc>, window_params = [{transform_indices = @transform_0, window_bounds = array<i64: 8, 128>}, {transform_indices = @transform_1, window_bounds = array<i64: 128, 128>}, {transform_indices = @transform_2, window_bounds = array<i64: 1, 128>}, {transform_indices = @transform_3, window_bounds = array<i64: 1, 128>}, {transform_indices = @transform_4, window_bounds = array<i64: 8, 128>}]} {
    %c0_i32 = arith.constant 0 : i32
    %0 = arith.cmpi eq, %arg1, %c0_i32 : i32
    %1 = arith.extui %0 : i1 to i32
    %c0_i32_0 = arith.constant 0 : i32
    %2 = arith.cmpi ne, %1, %c0_i32_0 : i32
    scf.if %2 {
      %cst_10 = arith.constant 0.000000e+00 : f32
      %12 = vector.broadcast %cst_10 : f32 to vector<8x128xf32>
      %c0_11 = arith.constant 0 : index
      %c0_12 = arith.constant 0 : index
      %13 = vector.load %arg7[%c0_11, %c0_12] : memref<8x128xf32, #tpu.memory_space<vmem>>, vector<8x128xf32>
      tpu.vector_store %arg7[%c0_11, %c0_12], %12 {strides = array<i32>} : memref<8x128xf32, #tpu.memory_space<vmem>>, vector<8x128xf32>,
    } else {
    }
    %c0 = arith.constant 0 : index
    %c0_1 = arith.constant 0 : index
    %3 = vector.load %arg7[%c0, %c0_1] : memref<8x128xf32, #tpu.memory_space<vmem>>, vector<8x128xf32>
    %c0_2 = arith.constant 0 : index
    %c0_3 = arith.constant 0 : index
    %4 = vector.load %arg2[%c0_2, %c0_3] : memref<8x128xbf16, #tpu.memory_space<vmem>>, vector<8x128xbf16>
    %c0_4 = arith.constant 0 : index
    %c0_5 = arith.constant 0 : index
    %5 = vector.load %arg3[%c0_4, %c0_5] : memref<128x128xbf16, #tpu.memory_space<vmem>>, vector<128x128xbf16>
    %cst = arith.constant dense<0.000000e+00> : vector<8x128xf32>
    %6 = tpu.matmul %4, %5, %cst {dimension_numbers = #tpu.dot_dimension_numbers<[1], [0], [0], [1], [0, 0, 1, 1], [], []>} : vector<8x128xbf16>, vector<128x128xbf16>, vector<8x128xf32> -> vector<8x128xf32>
    %7 = arith.addf %3, %6 : vector<8x128xf32>
    %c0_6 = arith.constant 0 : index
    %c0_7 = arith.constant 0 : index
    %8 = vector.load %arg7[%c0_6, %c0_7] : memref<8x128xf32, #tpu.memory_space<vmem>>, vector<8x128xf32>
    tpu.vector_store %arg7[%c0_6, %c0_7], %7 {strides = array<i32>} : memref<8x128xf32, #tpu.memory_space<vmem>>, vector<8x128xf32>,
    %c0_i32_8 = arith.constant 0 : i32
    %9 = arith.cmpi eq, %arg1, %c0_i32_8 : i32
    %10 = arith.extui %9 : i1 to i32
    %c0_i32_9 = arith.constant 0 : i32
    %11 = arith.cmpi ne, %10, %c0_i32_9 : i32
    scf.if %11 {
      %c0_10 = arith.constant 0 : index
      %c0_11 = arith.constant 0 : index
      %12 = vector.load %arg7[%c0_10, %c0_11] : memref<8x128xf32, #tpu.memory_space<vmem>>, vector<8x128xf32>
      %cst_12 = arith.constant dense<0.000000e+00> : vector<128xf32>
      %13 = vector.multi_reduction <add>, %12, %cst_12 [0] : vector<8x128xf32> to vector<128xf32>
      %14 = vector.shape_cast %13 : vector<128xf32> to vector<1x128xf32>
      %15 = arith.mulf %12, %12 : vector<8x128xf32>
      %cst_13 = arith.constant dense<0.000000e+00> : vector<128xf32>
      %16 = vector.multi_reduction <add>, %15, %cst_13 [0] : vector<8x128xf32> to vector<128xf32>
      %17 = vector.shape_cast %16 : vector<128xf32> to vector<1x128xf32>
      %cst_14 = arith.constant 1.250000e-01 : f32
      %18 = vector.broadcast %cst_14 : f32 to vector<1x128xf32>
      %19 = arith.mulf %14, %18 : vector<1x128xf32>
      %cst_15 = arith.constant 1.250000e-01 : f32
      %20 = vector.broadcast %cst_15 : f32 to vector<1x128xf32>
      %21 = arith.mulf %17, %20 : vector<1x128xf32>
      %22 = arith.mulf %19, %19 : vector<1x128xf32>
      %23 = arith.subf %21, %22 : vector<1x128xf32>
      %24 = vector.broadcast %19 : vector<1x128xf32> to vector<8x128xf32>
      %25 = arith.subf %12, %24 : vector<8x128xf32>
      %cst_16 = arith.constant 9.99999974E-6 : f32
      %26 = vector.broadcast %cst_16 : f32 to vector<1x128xf32>
      %27 = arith.addf %23, %26 : vector<1x128xf32>
      %28 = math.rsqrt %27 : vector<1x128xf32>
      %29 = vector.broadcast %28 : vector<1x128xf32> to vector<8x128xf32>
      %30 = arith.mulf %25, %29 : vector<8x128xf32>
      %c0_17 = arith.constant 0 : index
      %c0_18 = arith.constant 0 : index
      %31 = vector.load %arg4[%c0_17, %c0_18] : memref<1x128xf32, #tpu.memory_space<vmem>>, vector<1x128xf32>
      %32 = vector.broadcast %31 : vector<1x128xf32> to vector<8x128xf32>
      %33 = arith.mulf %30, %32 : vector<8x128xf32>
      %c0_19 = arith.constant 0 : index
      %c0_20 = arith.constant 0 : index
      %34 = vector.load %arg5[%c0_19, %c0_20] : memref<1x128xf32, #tpu.memory_space<vmem>>, vector<1x128xf32>
      %35 = vector.broadcast %34 : vector<1x128xf32> to vector<8x128xf32>
      %36 = arith.addf %33, %35 : vector<8x128xf32>
      %c0_21 = arith.constant 0 : index
      %c0_22 = arith.constant 0 : index
      %37 = vector.load %arg6[%c0_21, %c0_22] : memref<8x128xf32, #tpu.memory_space<vmem>>, vector<8x128xf32>
      tpu.vector_store %arg6[%c0_21, %c0_22], %36 {strides = array<i32>} : memref<8x128xf32, #tpu.memory_space<vmem>>, vector<8x128xf32>,
    } else {
    }
    return
  }
  func.func @transform_0(%arg0: i32, %arg1: i32) -> (i32, i32) {
    %c0_i32 = arith.constant 0 : i32
    %c0_i32_0 = arith.constant 0 : i32
    return %c0_i32, %arg1 : i32, i32
  }
  func.func @transform_1(%arg0: i32, %arg1: i32) -> (i32, i32) {
    %c0_i32 = arith.constant 0 : i32
    return %arg1, %arg0 : i32, i32
  }
  func.func @transform_2(%arg0: i32, %arg1: i32) -> (i32, i32) {
    %c0_i32 = arith.constant 0 : i32
    %c0_i32_0 = arith.constant 0 : i32
    return %c0_i32, %arg0 : i32, i32
  }
  func.func @transform_3(%arg0: i32, %arg1: i32) -> (i32, i32) {
    %c0_i32 = arith.constant 0 : i32
    %c0_i32_0 = arith.constant 0 : i32
    return %c0_i32, %arg0 : i32, i32
  }
  func.func @transform_4(%arg0: i32, %arg1: i32) -> (i32, i32) {
    %c0_i32 = arith.constant 0 : i32
    %c0_i32_0 = arith.constant 0 : i32
    return %c0_i32, %arg0 : i32, i32
  }
}

</mosaic_0001>

<llo_original>
// kernel: _lambda_.3
$region0: #{_lambda_.3}
  #allocation0 [shape = 'u32[]', space=smem, size = 0x4, offset = 0x4, fixed_abs, tag = 'smem constant byte address 0x4 - core index']
  #allocation1 [shape = 'u32[144,128]{1,0:T(1,128)}', space=vmem, size = 0x12000, scoped, tag = 'internal scratch']
  #allocation2 [shape = 'f32[8,128]{1,0:T(8,128)}', space=vmem, size = 0x1000, scoped, tag = 'scratch operand']
  %s0 = inlined_call_operand.vmem [shape: bf16[8,128], index: 0, kind: input, shape index: {}]
  %s1 = inlined_call_operand.vmem [shape: bf16[128,128], index: 1, kind: input, shape index: {}]
  %s2 = inlined_call_operand.vmem [shape: f32[1,128], index: 2, kind: input, shape index: {}]
  %s3 = inlined_call_operand.vmem [shape: f32[1,128], index: 3, kind: input, shape index: {}]
  %s4 = inlined_call_operand.hbm [shape: f32[8,128], index: 4, kind: output, shape index: {}]
  %s5 = sld [smem:[#allocation0]]
  $region34: #{_lambda_.3} parent=0
    _
  %s7 = ssub.s32 1, %s5
  %s8 = scalar_select 0, %s7, %s5
  $region1: #{_lambda_.3} parent=0
    #allocation3 [shape = 'u8[4096]{0}', space=vmem, size = 0x1000, scoped, tag = 'output window, operand 0, single buffered']
    #allocation4 [shape = 's32[1]{0}', space=sflag, size = 0x4, scoped, tag = 'scoped memory for _lambda_.3']
    %9 = vsyncpa [#allocation4], 0
    // Predicated region
    $region2: #{_lambda_.3} parent=1 // pred_check
      _
    $region3: #{_lambda_.3} parent=1 // pred_check_branch
      %11 = sbr.rel (0) target = $region5
    $region4: #{_lambda_.3} parent=1 // pred_region
      _
    $region5: #{_lambda_.3} parent=1 // pred_fallthru
      _
    // Predicated region
    $region6: #{_lambda_.3} parent=1 // pred_check
      _
    $region7: #{_lambda_.3} parent=1 // pred_check_branch
      %13 = sbr.rel (0) target = $region9
    $region8: #{_lambda_.3} parent=1 // pred_region
      _
    $region9: #{_lambda_.3} parent=1 // pred_fallthru
      _
    // Predicated region
    $region10: #{_lambda_.3} parent=1 // pred_check
      _
    $region11: #{_lambda_.3} parent=1 // pred_check_branch
      %15 = sbr.rel (0) target = $region13
    $region12: #{_lambda_.3} parent=1 // pred_region
      _
    $region13: #{_lambda_.3} parent=1 // pred_fallthru
      _
    // Predicated region
    $region14: #{_lambda_.3} parent=1 // pred_check
      _
    $region15: #{_lambda_.3} parent=1 // pred_check_branch
      %17 = sbr.rel (0) target = $region17
    $region16: #{_lambda_.3} parent=1 // pred_region
      _
    $region17: #{_lambda_.3} parent=1 // pred_fallthru
      _
    %p19 = scmp.eq.s32.totalorder 0, 0
    // Predicated region
    $region18: #{_lambda_.3} parent=1 // pred_check
      %p20 = pneg %p19
    $region19: #{_lambda_.3} parent=1 // pred_check_branch
      %22 = sbr.rel (%p20) target = $region21
    $region20: #{_lambda_.3} parent=1 // pred_region
      %23 = vst [vmem:[#allocation2] sm:$0xff] 0.0
    $region21: #{_lambda_.3} parent=1 // pred_fallthru
      _
    %v24 = vld [vmem:[#allocation2] sm:$0xff]
    %v25 = vld [vmem:[%s0] sm:$0xf]
    %v26 = vld [vmem:[%s1] sm:$0xf]
    %v27 = vld [vmem:[%s1 + $0x4] sm:$0xf]
    %v28 = vld [vmem:[%s1 + $0x8] sm:$0xf]
    %v29 = vld [vmem:[%s1 + $0xc] sm:$0xf]
    %v30 = vld [vmem:[%s1 + $0x10] sm:$0xf]
    %v31 = vld [vmem:[%s1 + $0x14] sm:$0xf]
    %v32 = vld [vmem:[%s1 + $0x18] sm:$0xf]
    %v33 = vld [vmem:[%s1 + $0x1c] sm:$0xf]
    %v34 = vld [vmem:[%s1 + $0x20] sm:$0xf]
    %v35 = vld [vmem:[%s1 + $0x24] sm:$0xf]
    %v36 = vld [vmem:[%s1 + $0x28] sm:$0xf]
    %v37 = vld [vmem:[%s1 + $0x2c] sm:$0xf]
    %v38 = vld [vmem:[%s1 + $0x30] sm:$0xf]
    %v39 = vld [vmem:[%s1 + $0x34] sm:$0xf]
    %v40 = vld [vmem:[%s1 + $0x38] sm:$0xf]
    %v41 = vld [vmem:[%s1 + $0x3c] sm:$0xf]
    %v58 = vunpack.c.l.b16 %v26
    %v59 = vunpack.c.l.b16 %v27
    %v60 = vunpack.c.l.b16 %v28
    %v61 = vunpack.c.l.b16 %v29
    %v62 = vunpack.c.l.b16 %v30
    %v63 = vunpack.c.l.b16 %v31
    %v64 = vunpack.c.l.b16 %v32
    %v65 = vunpack.c.l.b16 %v33
    %v66 = vunpack.c.l.b16 %v34
    %v67 = vunpack.c.l.b16 %v35
    %v68 = vunpack.c.l.b16 %v36
    %v69 = vunpack.c.l.b16 %v37
    %v70 = vunpack.c.l.b16 %v38
    %v71 = vunpack.c.l.b16 %v39
    %v72 = vunpack.c.l.b16 %v40
    %v73 = vunpack.c.l.b16 %v41
    %v74 = vpack.c.b16 %v59, %v58
    %v75 = vpack.c.b16 %v61, %v60
    %v76 = vpack.c.b16 %v63, %v62
    %v77 = vpack.c.b16 %v65, %v64
    %v78 = vpack.c.b16 %v67, %v66
    %v79 = vpack.c.b16 %v69, %v68
    %v80 = vpack.c.b16 %v71, %v70
    %v81 = vpack.c.b16 %v73, %v72
    %90 = vmatprep.subr.bf16.mxu0 0
    %91 = vmatpush1.bf16.msra.mxu0 %v81
    %92 = vmatprep.subr.bf16.mxu0 0
    %93 = vmatpush1.bf16.msra.mxu0 %v80
    %94 = vmatprep.subr.bf16.mxu0 0
    %95 = vmatpush1.bf16.msra.mxu0 %v79
    %96 = vmatprep.subr.bf16.mxu0 0
    %97 = vmatpush1.bf16.msra.mxu0 %v78
    %98 = vmatprep.subr.bf16.mxu0 0
    %99 = vmatpush1.bf16.msra.mxu0 %v77
    %100 = vmatprep.subr.bf16.mxu0 0
    %101 = vmatpush1.bf16.msra.mxu0 %v76
    %102 = vmatprep.subr.bf16.mxu0 0
    %103 = vmatpush1.bf16.msra.mxu0 %v75
    %104 = vmatprep.subr.bf16.mxu0 0
    %105 = vmatpush1.bf16.msra.mxu0 %v74
    %106 = vmatprep.subr.bf16.mxu0 0
    %107 = vmatpush2.bf16.msra.mxu0 0
    %108 = vmatprep.subr.bf16.mxu0 0
    %109 = vmatpush2.bf16.msra.mxu0 0
    %110 = vmatprep.subr.bf16.mxu0 0
    %111 = vmatpush2.bf16.msra.mxu0 0
    %112 = vmatprep.subr.bf16.mxu0 0
    %113 = vmatpush2.bf16.msra.mxu0 0
    %114 = vmatprep.subr.bf16.mxu0 0
    %115 = vmatpush2.bf16.msra.mxu0 0
    %116 = vmatprep.subr.bf16.mxu0 0
    %117 = vmatpush2.bf16.msra.mxu0 0
    %118 = vmatprep.subr.bf16.mxu0 0
    %119 = vmatpush2.bf16.msra.mxu0 0
    %120 = vmatprep.subr.bf16.mxu0 0
    %121 = vmatpush2.bf16.msra.mxu0 0
    %122 = vmatprep.mubr.bf16.mxu0 0
    %123 = vmatmul.mubr.bf16.gmra.mxu0 %v25
    %v124 = vpop.f32.mrf.mxu0
    %v125 = vadd.f32 0.0, %v124
    %v126 = vpop.f32.mrf.mxu0
    %v127 = vpop.f32.mrf.mxu0
    %v128 = vpop.f32.mrf.mxu0
    %129 = vdwg.mxu0
    %v130 = vadd.f32 %v24, %v125
    %131 = vst [vmem:[#allocation2] sm:$0xff] %v130
    // Predicated region
    $region22: #{_lambda_.3} parent=1 // pred_check
      %p132 = pneg %p19
    $region23: #{_lambda_.3} parent=1 // pred_check_branch
      %134 = sbr.rel (%p132) target = $region25
    $region24: #{_lambda_.3} parent=1 // pred_region
      %v135 = vld [vmem:[#allocation2] sm:$0xff]
      %v136 = vrot.slane %v135, 4
      %v137 = vadd.f32 %v135, %v136
      %v138 = vrot.slane %v137, 2
      %v139 = vadd.f32 %v137, %v138
      %v140 = vrot.slane %v139, 1
      %v141 = vadd.f32 %v139, %v140
      %v142 = vmul.f32 %v135, %v135
      %v143 = vrot.slane %v142, 4
      %v144 = vadd.f32 %v142, %v143
      %v145 = vrot.slane %v144, 2
      %v146 = vadd.f32 %v144, %v145
      %v147 = vrot.slane %v146, 1
      %v148 = vadd.f32 %v146, %v147
      %v149 = vmul.f32 %v141, 0.125
      %v150 = vmul.f32 %v148, 0.125
      %v151 = vmul.f32 %v149, %v149
      %v152 = vsub.f32 %v150, %v151
      %v153 = vsub.f32 %v135, %v149
      %v154 = vadd.f32 %v152, 1e-05
      %v155 = vrsqrt.pop %v154
      %v156 = vmul.f32 %v153, %v155
      %v157 = vld [vmem:[%s2] sm:$0x1]
      %v159 = vlaneseq
      %v160 = vshrl.u32 %v159, 7
      %v161 = vsub.s32 0, %v160
      %v162 = vrot.slane %v157, %v161
      %v164 = vmul.f32 %v156, %v162
      %v165 = vld [vmem:[%s3] sm:$0x1]
      %v167 = vlaneseq
      %v168 = vshrl.u32 %v167, 7
      %v169 = vsub.s32 0, %v168
      %v170 = vrot.slane %v165, %v169
      %v172 = vadd.f32 %v164, %v170
      %173 = vst [vmem:[#allocation3] sm:$0xff] %v172
    $region25: #{_lambda_.3} parent=1 // pred_fallthru
      _
    // Predicated region
    $region26: #{_lambda_.3} parent=1 // pred_check
      _
    $region27: #{_lambda_.3} parent=1 // pred_check_branch
      %175 = sbr.rel (0) target = $region29
    $region28: #{_lambda_.3} parent=1 // pred_region
      %s177 = ssub.s32 128, 128
      %178 = vsyncadd [#allocation4], %s177
      %s180 = sshll.u32 [#allocation3], 4
      %s181 = int_to_ptr.vmem [resolvable:$true] %s180
      %183 = dma.vmem_to_hbm [thread:$0]  %s181, 128, %s4, [#allocation4]
    $region29: #{_lambda_.3} parent=1 // pred_fallthru
      _
    // Predicated region
    $region30: #{_lambda_.3} parent=1 // pred_check
      _
    $region31: #{_lambda_.3} parent=1 // pred_check_branch
      %185 = sbr.rel (0) target = $region33
    $region32: #{_lambda_.3} parent=1 // pred_region
      %186 = dma.done [#allocation4], 128
    $region33: #{_lambda_.3} parent=1 // pred_fallthru
      _
    %187 = vsyncpa [#allocation4], 1

// kernel: _lambda_.2
$region0: #{_lambda_.2}
  #allocation0 [shape = 'u32[]', space=smem, size = 0x4, offset = 0x4, fixed_abs, tag = 'smem constant byte address 0x4 - core index']
  #allocation1 [shape = 'u32[144,128]{1,0:T(1,128)}', space=vmem, size = 0x12000, scoped, tag = 'internal scratch']
  #allocation2 [shape = 'f32[8,128]{1,0:T(8,128)}', space=vmem, size = 0x1000, scoped, tag = 'scratch operand']
  %s0 = inlined_call_operand.vmem [shape: bf16[8,512], index: 0, kind: input, shape index: {}]
  %s1 = inlined_call_operand.vmem [shape: bf16[512,128], index: 1, kind: input, shape index: {}]
  %s2 = inlined_call_operand.vmem [shape: f32[1,128], index: 2, kind: input, shape index: {}]
  %s3 = inlined_call_operand.vmem [shape: f32[1,128], index: 3, kind: input, shape index: {}]
  %s4 = inlined_call_operand.vmem [shape: bf16[8,128], index: 4, kind: output, shape index: {}]
  %s5 = sld [smem:[#allocation0]]
  $region34: #{_lambda_.2} parent=0
    _
  %s7 = ssub.s32 1, %s5
  %s8 = scalar_select 0, %s7, %s5
  // Predicated region
  $region2: #{_lambda_.2} parent=0 // pred_check
    _
  $region3: #{_lambda_.2} parent=0 // pred_check_branch
    %10 = sbr.rel (0) target = $region5
  $region4: #{_lambda_.2} parent=0 // pred_region
    _
  $region5: #{_lambda_.2} parent=0 // pred_fallthru
    _
  // Predicated region
  $region6: #{_lambda_.2} parent=0 // pred_check
    _
  $region7: #{_lambda_.2} parent=0 // pred_check_branch
    %12 = sbr.rel (0) target = $region9
  $region8: #{_lambda_.2} parent=0 // pred_region
    _
  $region9: #{_lambda_.2} parent=0 // pred_fallthru
    _
  // Predicated region
  $region10: #{_lambda_.2} parent=0 // pred_check
    _
  $region11: #{_lambda_.2} parent=0 // pred_check_branch
    %14 = sbr.rel (0) target = $region13
  $region12: #{_lambda_.2} parent=0 // pred_region
    _
  $region13: #{_lambda_.2} parent=0 // pred_fallthru
    _
  // Predicated region
  $region14: #{_lambda_.2} parent=0 // pred_check
    _
  $region15: #{_lambda_.2} parent=0 // pred_check_branch
    %16 = sbr.rel (0) target = $region17
  $region16: #{_lambda_.2} parent=0 // pred_region
    _
  $region17: #{_lambda_.2} parent=0 // pred_fallthru
    _
  %p18 = scmp.eq.s32.totalorder 0, 0
  // Predicated region
  $region18: #{_lambda_.2} parent=0 // pred_check
    %p19 = pneg %p18
  $region19: #{_lambda_.2} parent=0 // pred_check_branch
    %21 = sbr.rel (%p19) target = $region21
  $region20: #{_lambda_.2} parent=0 // pred_region
    %22 = vst [vmem:[#allocation2] sm:$0xff] 0.0
  $region21: #{_lambda_.2} parent=0 // pred_fallthru
    _
  %v23 = vld [vmem:[#allocation2] sm:$0xff]
  %v24 = vld [vmem:[%s0] sm:$0xff]
  %v25 = vld [vmem:[%s0 + $0x8] sm:$0xff]
  %v26 = vld [vmem:[%s1] sm:$0xf]
  %v27 = vld [vmem:[%s1 + $0x4] sm:$0xf]
  %v28 = vld [vmem:[%s1 + $0x8] sm:$0xf]
  %v29 = vld [vmem:[%s1 + $0xc] sm:$0xf]
  %v30 = vld [vmem:[%s1 + $0x10] sm:$0xf]
  %v31 = vld [vmem:[%s1 + $0x14] sm:$0xf]
  %v32 = vld [vmem:[%s1 + $0x18] sm:$0xf]
  %v33 = vld [vmem:[%s1 + $0x1c] sm:$0xf]
  %v34 = vld [vmem:[%s1 + $0x20] sm:$0xf]
  %v35 = vld [vmem:[%s1 + $0x24] sm:$0xf]
  %v36 = vld [vmem:[%s1 + $0x28] sm:$0xf]
  %v37 = vld [vmem:[%s1 + $0x2c] sm:$0xf]
  %v38 = vld [vmem:[%s1 + $0x30] sm:$0xf]
  %v39 = vld [vmem:[%s1 + $0x34] sm:$0xf]
  %v40 = vld [vmem:[%s1 + $0x38] sm:$0xf]
  %v41 = vld [vmem:[%s1 + $0x3c] sm:$0xf]
  %v42 = vld [vmem:[%s1 + $0x40] sm:$0xf]
  %v43 = vld [vmem:[%s1 + $0x44] sm:$0xf]
  %v44 = vld [vmem:[%s1 + $0x48] sm:$0xf]
  %v45 = vld [vmem:[%s1 + $0x4c] sm:$0xf]
  %v46 = vld [vmem:[%s1 + $0x50] sm:$0xf]
  %v47 = vld [vmem:[%s1 + $0x54] sm:$0xf]
  %v48 = vld [vmem:[%s1 + $0x58] sm:$0xf]
  %v49 = vld [vmem:[%s1 + $0x5c] sm:$0xf]
  %v50 = vld [vmem:[%s1 + $0x60] sm:$0xf]
  %v51 = vld [vmem:[%s1 + $0x64] sm:$0xf]
  %v52 = vld [vmem:[%s1 + $0x68] sm:$0xf]
  %v53 = vld [vmem:[%s1 + $0x6c] sm:$0xf]
  %v54 = vld [vmem:[%s1 + $0x70] sm:$0xf]
  %v55 = vld [vmem:[%s1 + $0x74] sm:$0xf]
  %v56 = vld [vmem:[%s1 + $0x78] sm:$0xf]
  %v57 = vld [vmem:[%s1 + $0x7c] sm:$0xf]
  %v58 = vld [vmem:[%s1 + $0x80] sm:$0xf]
  %v59 = vld [vmem:[%s1 + $0x84] sm:$0xf]
  %v60 = vld [vmem:[%s1 + $0x88] sm:$0xf]
  %v61 = vld [vmem:[%s1 + $0x8c] sm:$0xf]
  %v62 = vld [vmem:[%s1 + $0x90] sm:$0xf]
  %v63 = vld [vmem:[%s1 + $0x94] sm:$0xf]
  %v64 = vld [vmem:[%s1 + $0x98] sm:$0xf]
  %v65 = vld [vmem:[%s1 + $0x9c] sm:$0xf]
  %v66 = vld [vmem:[%s1 + $0xa0] sm:$0xf]
  %v67 = vld [vmem:[%s1 + $0xa4] sm:$0xf]
  %v68 = vld [vmem:[%s1 + $0xa8] sm:$0xf]
  %v69 = vld [vmem:[%s1 + $0xac] sm:$0xf]
  %v70 = vld [vmem:[%s1 + $0xb0] sm:$0xf]
  %v71 = vld [vmem:[%s1 + $0xb4] sm:$0xf]
  %v72 = vld [vmem:[%s1 + $0xb8] sm:$0xf]
  %v73 = vld [vmem:[%s1 + $0xbc] sm:$0xf]
  %v74 = vld [vmem:[%s1 + $0xc0] sm:$0xf]
  %v75 = vld [vmem:[%s1 + $0xc4] sm:$0xf]
  %v76 = vld [vmem:[%s1 + $0xc8] sm:$0xf]
  %v77 = vld [vmem:[%s1 + $0xcc] sm:$0xf]
  %v78 = vld [vmem:[%s1 + $0xd0] sm:$0xf]
  %v79 = vld [vmem:[%s1 + $0xd4] sm:$0xf]
  %v80 = vld [vmem:[%s1 + $0xd8] sm:$0xf]
  %v81 = vld [vmem:[%s1 + $0xdc] sm:$0xf]
  %v82 = vld [vmem:[%s1 + $0xe0] sm:$0xf]
  %v83 = vld [vmem:[%s1 + $0xe4] sm:$0xf]
  %v84 = vld [vmem:[%s1 + $0xe8] sm:$0xf]
  %v85 = vld [vmem:[%s1 + $0xec] sm:$0xf]
  %v86 = vld [vmem:[%s1 + $0xf0] sm:$0xf]
  %v87 = vld [vmem:[%s1 + $0xf4] sm:$0xf]
  %v88 = vld [vmem:[%s1 + $0xf8] sm:$0xf]
  %v89 = vld [vmem:[%s1 + $0xfc] sm:$0xf]
  %v92 = vunpack.c.l.b16 %v24
  %v93 = vunpack.c.h.b16 %v24
  %v94 = vunpack.c.l.b16 %v25
  %v95 = vunpack.c.h.b16 %v25
  %v96 = vpack.c.b16 %v92, %v92
  %v97 = vpack.c.b16 %v93, %v93
  %v98 = vpack.c.b16 %v94, %v94
  %v99 = vpack.c.b16 %v95, %v95
  %v168 = vunpack.c.l.b16 %v26
  %v169 = vunpack.c.l.b16 %v27
  %v170 = vunpack.c.l.b16 %v28
  %v171 = vunpack.c.l.b16 %v29
  %v172 = vunpack.c.l.b16 %v30
  %v173 = vunpack.c.l.b16 %v31
  %v174 = vunpack.c.l.b16 %v32
  %v175 = vunpack.c.l.b16 %v33
  %v176 = vunpack.c.l.b16 %v34
  %v177 = vunpack.c.l.b16 %v35
  %v178 = vunpack.c.l.b16 %v36
  %v179 = vunpack.c.l.b16 %v37
  %v180 = vunpack.c.l.b16 %v38
  %v181 = vunpack.c.l.b16 %v39
  %v182 = vunpack.c.l.b16 %v40
  %v183 = vunpack.c.l.b16 %v41
  %v184 = vunpack.c.l.b16 %v42
  %v185 = vunpack.c.l.b16 %v43
  %v186 = vunpack.c.l.b16 %v44
  %v187 = vunpack.c.l.b16 %v45
  %v188 = vunpack.c.l.b16 %v46
  %v189 = vunpack.c.l.b16 %v47
  %v190 = vunpack.c.l.b16 %v48
  %v191 = vunpack.c.l.b16 %v49
  %v192 = vunpack.c.l.b16 %v50
  %v193 = vunpack.c.l.b16 %v51
  %v194 = vunpack.c.l.b16 %v52
  %v195 = vunpack.c.l.b16 %v53
  %v196 = vunpack.c.l.b16 %v54
  %v197 = vunpack.c.l.b16 %v55
  %v198 = vunpack.c.l.b16 %v56
  %v199 = vunpack.c.l.b16 %v57
  %v200 = vunpack.c.l.b16 %v58
  %v201 = vunpack.c.l.b16 %v59
  %v202 = vunpack.c.l.b16 %v60
  %v203 = vunpack.c.l.b16 %v61
  %v204 = vunpack.c.l.b16 %v62
  %v205 = vunpack.c.l.b16 %v63
  %v206 = vunpack.c.l.b16 %v64
  %v207 = vunpack.c.l.b16 %v65
  %v208 = vunpack.c.l.b16 %v66
  %v209 = vunpack.c.l.b16 %v67
  %v210 = vunpack.c.l.b16 %v68
  %v211 = vunpack.c.l.b16 %v69
  %v212 = vunpack.c.l.b16 %v70
  %v213 = vunpack.c.l.b16 %v71
  %v214 = vunpack.c.l.b16 %v72
  %v215 = vunpack.c.l.b16 %v73
  %v216 = vunpack.c.l.b16 %v74
  %v217 = vunpack.c.l.b16 %v75
  %v218 = vunpack.c.l.b16 %v76
  %v219 = vunpack.c.l.b16 %v77
  %v220 = vunpack.c.l.b16 %v78
  %v221 = vunpack.c.l.b16 %v79
  %v222 = vunpack.c.l.b16 %v80
  %v223 = vunpack.c.l.b16 %v81
  %v224 = vunpack.c.l.b16 %v82
  %v225 = vunpack.c.l.b16 %v83
  %v226 = vunpack.c.l.b16 %v84
  %v227 = vunpack.c.l.b16 %v85
  %v228 = vunpack.c.l.b16 %v86
  %v229 = vunpack.c.l.b16 %v87
  %v230 = vunpack.c.l.b16 %v88
  %v231 = vunpack.c.l.b16 %v89
  %v232 = vpack.c.b16 %v169, %v168
  %v233 = vpack.c.b16 %v171, %v170
  %v234 = vpack.c.b16 %v173, %v172
  %v235 = vpack.c.b16 %v175, %v174
  %v236 = vpack.c.b16 %v177, %v176
  %v237 = vpack.c.b16 %v179, %v178
  %v238 = vpack.c.b16 %v181, %v180
  %v239 = vpack.c.b16 %v183, %v182
  %v240 = vpack.c.b16 %v185, %v184
  %v241 = vpack.c.b16 %v187, %v186
  %v242 = vpack.c.b16 %v189, %v188
  %v243 = vpack.c.b16 %v191, %v190
  %v244 = vpack.c.b16 %v193, %v192
  %v245 = vpack.c.b16 %v195, %v194
  %v246 = vpack.c.b16 %v197, %v196
  %v247 = vpack.c.b16 %v199, %v198
  %v248 = vpack.c.b16 %v201, %v200
  %v249 = vpack.c.b16 %v203, %v202
  %v250 = vpack.c.b16 %v205, %v204
  %v251 = vpack.c.b16 %v207, %v206
  %v252 = vpack.c.b16 %v209, %v208
  %v253 = vpack.c.b16 %v211, %v210
  %v254 = vpack.c.b16 %v213, %v212
  %v255 = vpack.c.b16 %v215, %v214
  %v256 = vpack.c.b16 %v217, %v216
  %v257 = vpack.c.b16 %v219, %v218
  %v258 = vpack.c.b16 %v221, %v220
  %v259 = vpack.c.b16 %v223, %v222
  %v260 = vpack.c.b16 %v225, %v224
  %v261 = vpack.c.b16 %v227, %v226
  %v262 = vpack.c.b16 %v229, %v228
  %v263 = vpack.c.b16 %v231, %v230
  %296 = vmatprep.subr.bf16.mxu0 0
  %297 = vmatpush1.bf16.msra.mxu0 %v239
  %298 = vmatprep.subr.bf16.mxu0 0
  %299 = vmatpush1.bf16.msra.mxu0 %v238
  %300 = vmatprep.subr.bf16.mxu0 0
  %301 = vmatpush1.bf16.msra.mxu0 %v237
  %302 = vmatprep.subr.bf16.mxu0 0
  %303 = vmatpush1.bf16.msra.mxu0 %v236
  %304 = vmatprep.subr.bf16.mxu0 0
  %305 = vmatpush1.bf16.msra.mxu0 %v235
  %306 = vmatprep.subr.bf16.mxu0 0
  %307 = vmatpush1.bf16.msra.mxu0 %v234
  %308 = vmatprep.subr.bf16.mxu0 0
  %309 = vmatpush1.bf16.msra.mxu0 %v233
  %310 = vmatprep.subr.bf16.mxu0 0
  %311 = vmatpush1.bf16.msra.mxu0 %v232
  %312 = vmatprep.subr.bf16.mxu0 0
  %313 = vmatpush2.bf16.msra.mxu0 %v247
  %314 = vmatprep.subr.bf16.mxu0 0
  %315 = vmatpush2.bf16.msra.mxu0 %v246
  %316 = vmatprep.subr.bf16.mxu0 0
  %317 = vmatpush2.bf16.msra.mxu0 %v245
  %318 = vmatprep.subr.bf16.mxu0 0
  %319 = vmatpush2.bf16.msra.mxu0 %v244
  %320 = vmatprep.subr.bf16.mxu0 0
  %321 = vmatpush2.bf16.msra.mxu0 %v243
  %322 = vmatprep.subr.bf16.mxu0 0
  %323 = vmatpush2.bf16.msra.mxu0 %v242
  %324 = vmatprep.subr.bf16.mxu0 0
  %325 = vmatpush2.bf16.msra.mxu0 %v241
  %326 = vmatprep.subr.bf16.mxu0 0
  %327 = vmatpush2.bf16.msra.mxu0 %v240
  %328 = vmatprep.mubr.bf16.mxu0 %v97
  %329 = vmatmul.mubr.bf16.gmra.mxu0 %v96
  %v330 = vpop.f32.mrf.mxu0
  %v331 = vadd.f32 0.0, %v330
  %v332 = vpop.f32.mrf.mxu0
  %v333 = vpop.f32.mrf.mxu0
  %v334 = vpop.f32.mrf.mxu0
  %335 = vdwg.mxu0
  %336 = vmatprep.subr.bf16.mxu0 0
  %337 = vmatpush1.bf16.msra.mxu0 %v255
  %338 = vmatprep.subr.bf16.mxu0 0
  %339 = vmatpush1.bf16.msra.mxu0 %v254
  %340 = vmatprep.subr.bf16.mxu0 0
  %341 = vmatpush1.bf16.msra.mxu0 %v253
  %342 = vmatprep.subr.bf16.mxu0 0
  %343 = vmatpush1.bf16.msra.mxu0 %v252
  %344 = vmatprep.subr.bf16.mxu0 0
  %345 = vmatpush1.bf16.msra.mxu0 %v251
  %346 = vmatprep.subr.bf16.mxu0 0
  %347 = vmatpush1.bf16.msra.mxu0 %v250
  %348 = vmatprep.subr.bf16.mxu0 0
  %349 = vmatpush1.bf16.msra.mxu0 %v249
  %350 = vmatprep.subr.bf16.mxu0 0
  %351 = vmatpush1.bf16.msra.mxu0 %v248
  %352 = vmatprep.subr.bf16.mxu0 0
  %353 = vmatpush2.bf16.msra.mxu0 %v263
  %354 = vmatprep.subr.bf16.mxu0 0
  %355 = vmatpush2.bf16.msra.mxu0 %v262
  %356 = vmatprep.subr.bf16.mxu0 0
  %357 = vmatpush2.bf16.msra.mxu0 %v261
  %358 = vmatprep.subr.bf16.mxu0 0
  %359 = vmatpush2.bf16.msra.mxu0 %v260
  %360 = vmatprep.subr.bf16.mxu0 0
  %361 = vmatpush2.bf16.msra.mxu0 %v259
  %362 = vmatprep.subr.bf16.mxu0 0
  %363 = vmatpush2.bf16.msra.mxu0 %v258
  %364 = vmatprep.subr.bf16.mxu0 0
  %365 = vmatpush2.bf16.msra.mxu0 %v257
  %366 = vmatprep.subr.bf16.mxu0 0
  %367 = vmatpush2.bf16.msra.mxu0 %v256
  %368 = vmatprep.mubr.bf16.mxu0 %v99
  %369 = vmatmul.mubr.bf16.gmra.mxu0 %v98
  %v370 = vpop.f32.mrf.mxu0
  %v371 = vadd.f32 %v331, %v370
  %v372 = vpop.f32.mrf.mxu0
  %v373 = vpop.f32.mrf.mxu0
  %v374 = vpop.f32.mrf.mxu0
  %375 = vdwg.mxu0
  %v376 = vadd.f32 %v23, %v371
  %377 = vst [vmem:[#allocation2] sm:$0xff] %v376
  // Predicated region
  $region22: #{_lambda_.2} parent=0 // pred_check
    %p378 = pneg %p18
  $region23: #{_lambda_.2} parent=0 // pred_check_branch
    %380 = sbr.rel (%p378) target = $region25
  $region24: #{_lambda_.2} parent=0 // pred_region
    %v381 = vld [vmem:[#allocation2] sm:$0xff]
    %v382 = vrot.slane %v381, 4
    %v383 = vadd.f32 %v381, %v382
    %v384 = vrot.slane %v383, 2
    %v385 = vadd.f32 %v383, %v384
    %v386 = vrot.slane %v385, 1
    %v387 = vadd.f32 %v385, %v386
    %v388 = vmul.f32 %v381, %v381
    %v389 = vrot.slane %v388, 4
    %v390 = vadd.f32 %v388, %v389
    %v391 = vrot.slane %v390, 2
    %v392 = vadd.f32 %v390, %v391
    %v393 = vrot.slane %v392, 1
    %v394 = vadd.f32 %v392, %v393
    %v395 = vmul.f32 %v387, 0.125
    %v396 = vmul.f32 %v394, 0.125
    %v397 = vmul.f32 %v395, %v395
    %v398 = vsub.f32 %v396, %v397
    %v399 = vsub.f32 %v381, %v395
    %v400 = vadd.f32 %v398, 1e-05
    %v401 = vrsqrt.pop %v400
    %v402 = vmul.f32 %v399, %v401
    %v403 = vld [vmem:[%s2] sm:$0x1]
    %v405 = vlaneseq
    %v406 = vshrl.u32 %v405, 7
    %v407 = vsub.s32 0, %v406
    %v408 = vrot.slane %v403, %v407
    %v410 = vmul.f32 %v402, %v408
    %v411 = vld [vmem:[%s3] sm:$0x1]
    %v413 = vlaneseq
    %v414 = vshrl.u32 %v413, 7
    %v415 = vsub.s32 0, %v414
    %v416 = vrot.slane %v411, %v415
    %v418 = vadd.f32 %v410, %v416
    %v419 = vmax.f32 %v418, 0.0
    %v420 = vpack.c.bf16 %v419, %v419
    %421 = vst [vmem:[%s4] sm:$0xf] %v420
  $region25: #{_lambda_.2} parent=0 // pred_fallthru
    _
  // Predicated region
  $region26: #{_lambda_.2} parent=0 // pred_check
    _
  $region27: #{_lambda_.2} parent=0 // pred_check_branch
    %423 = sbr.rel (0) target = $region29
  $region28: #{_lambda_.2} parent=0 // pred_region
    _
  $region29: #{_lambda_.2} parent=0 // pred_fallthru
    _
  // Predicated region
  $region30: #{_lambda_.2} parent=0 // pred_check
    _
  $region31: #{_lambda_.2} parent=0 // pred_check_branch
    %425 = sbr.rel (0) target = $region33
  $region32: #{_lambda_.2} parent=0 // pred_region
    _
  $region33: #{_lambda_.2} parent=0 // pred_fallthru
    _

</llo_original>
